<compile_context>
chip_gen: v7x
topology: tpu7x:2x2x1
jax: 0.10.0
libtpu: 0.0.40
codegen_flags: <defaults>
</compile_context>

<pallas_src>
import jax
import jax.numpy as jnp
import numpy as np
from jax.experimental import pallas as pl
from jax.experimental.pallas import tpu as pltpu


# ---------------------------------------------------------------------------
# Module forward: pure passthrough (true zero cost, zero HBM traffic).
# ---------------------------------------------------------------------------
def identity(x):
    """nn.Identity.forward(x) -> x.

    No pallas_call: aliasing via input_output_aliases only avoids a copy when
    the input buffer is donated; returning x is unconditionally zero-cost.
    """
    return x


# ---------------------------------------------------------------------------
# Physical-copy identity: chunked direct HBM->HBM DMA (no VMEM staging).
# ---------------------------------------------------------------------------
def _make_dma_copy_kernel(chunks):
    """Kernel issuing one HBM->HBM DMA per static (start, size) chunk, then waits."""

    def kernel(x_ref, o_ref, sem):
        copies = []
        for k, (start, size) in enumerate(chunks):
            cp = pltpu.make_async_copy(
                x_ref.at[pl.ds(start, size)],
                o_ref.at[pl.ds(start, size)],
                sem.at[k],
            )
            cp.start()
            copies.append(cp)
        for cp in copies:
            cp.wait()

    return kernel


def identity_copy(x, *, num_chunks=None):
    """Identity that returns a fresh buffer equal to x via direct HBM->HBM DMA."""
    if x.size == 0:
        return x

    orig_shape = x.shape
    if x.ndim == 0:
        x = x.reshape(1)

    dim0 = x.shape[0]
    itemsize = jnp.dtype(x.dtype).itemsize
    total_bytes = x.size * itemsize

    # A few back-to-back DMAs for large arrays (overlap issue/transfer); a single
    # DMA for small ones.  Chunks are static Python slices along the leading axis,
    # so any element count / dtype works with no padding.
    if num_chunks is None:
        num_chunks = 1 if total_bytes < (512 * 1024) else 8
    num_chunks = int(max(1, min(num_chunks, dim0)))

    base, rem = divmod(dim0, num_chunks)
    chunks = []
    start = 0
    for k in range(num_chunks):
        size = base + (1 if k < rem else 0)
        chunks.append((start, size))
        start += size
    chunks = tuple(chunks)

    out = pl.pallas_call(
        _make_dma_copy_kernel(chunks),
        out_shape=jax.ShapeDtypeStruct(x.shape, x.dtype),
        in_specs=[pl.BlockSpec(memory_space=pl.ANY)],   # raw HBM ref, no auto-DMA
        out_specs=pl.BlockSpec(memory_space=pl.ANY),    # raw HBM ref, written by DMA
        scratch_shapes=[pltpu.SemaphoreType.DMA((num_chunks,))],
        cost_estimate=pl.CostEstimate(
            flops=0, transcendentals=0, bytes_accessed=2 * total_bytes
        ),
    )(x)
    return out.reshape(orig_shape)


if __name__ == "__main__":
    key = jax.random.PRNGKey(0)
    k0, k1, k2, k3 = jax.random.split(key, 4)

    # Small NCHW-style input consistent with the module's usage.
    x = jax.random.normal(k0, (2, 4, 16, 16), dtype=jnp.float32)
    x_host = np.asarray(x)  # host-side reference taken before any kernel call

    y_pass = identity(x)                                   # module passthrough
    y_copy = jax.block_until_ready(identity_copy(x))       # Pallas DMA copy

    assert y_pass.shape == x.shape and y_pass.dtype == x.dtype
    assert y_copy.shape == x.shape and y_copy.dtype == x.dtype
    assert np.array_equal(np.asarray(y_pass), x_host)
    assert np.array_equal(np.asarray(y_copy), x_host)

    # Odd, non-multiple-of-128 shape: handled directly by DMA, no pad/slice.
    x2 = jax.random.normal(k1, (3, 5, 7), dtype=jnp.float32)
    x2_host = np.asarray(x2)
    y2 = jax.block_until_ready(identity_copy(x2))
    assert y2.shape == x2.shape and y2.dtype == x2.dtype
    assert np.array_equal(np.asarray(y2), x2_host)

    # Multi-chunk path (explicit num_chunks) on a 2-D array.
    x3 = jax.random.normal(k2, (64, 128), dtype=jnp.float32)
    x3_host = np.asarray(x3)
    y3 = jax.block_until_ready(identity_copy(x3, num_chunks=4))
    assert y3.shape == x3.shape and y3.dtype == x3.dtype
    assert np.array_equal(np.asarray(y3), x3_host)

    # Sub-32-bit dtype: DMA is layout/dtype agnostic, no sublane-packing concerns.
    x4 = jax.random.normal(k3, (2, 8, 32), dtype=jnp.bfloat16)
    x4_host = np.asarray(x4)
    y4 = jax.block_until_ready(identity_copy(x4))
    assert y4.shape == x4.shape and y4.dtype == x4.dtype
    assert np.array_equal(np.asarray(y4), x4_host)

    print("KERNEL_OK")
</pallas_src>

<mosaic_0001>
module attributes {stable_mosaic.version = 11 : i64} {
  func.func @kernel(%arg0: memref<2x4x16x16xf32, #tpu.memory_space<any>>, %arg1: memref<2x4x16x16xf32, #tpu.memory_space<any>>, %arg2: memref<1x!tpu.dma_semaphore, #tpu.memory_space<semaphore_mem>>) attributes {dimension_semantics = [], scalar_prefetch = 0 : i64, scratch_operands = 1 : i64, tpu.core_type = #tpu.core_type<tc>} {
    %c0_i32 = arith.constant 0 : i32
    %c0_i32_0 = arith.constant 0 : i32
    %c0_i32_1 = arith.constant 0 : i32
    %c0_i32_2 = arith.constant 0 : i32
    %c0_i32_3 = arith.constant 0 : i32
    %0 = tpu.memref_slice %arg0[%c0_i32_0, %c0_i32_1, %c0_i32_2, %c0_i32_3] : memref<2x4x16x16xf32, #tpu.memory_space<any>> -> memref<2x4x16x16xf32, #tpu.memory_space<any>>
    %c0_i32_4 = arith.constant 0 : i32
    %c0_i32_5 = arith.constant 0 : i32
    %c0_i32_6 = arith.constant 0 : i32
    %c0_i32_7 = arith.constant 0 : i32
    %1 = tpu.memref_slice %arg1[%c0_i32_4, %c0_i32_5, %c0_i32_6, %c0_i32_7] : memref<2x4x16x16xf32, #tpu.memory_space<any>> -> memref<2x4x16x16xf32, #tpu.memory_space<any>>
    %2 = tpu.memref_slice %arg2[%c0_i32] : memref<1x!tpu.dma_semaphore, #tpu.memory_space<semaphore_mem>> -> memref<1x!tpu.dma_semaphore, #tpu.memory_space<semaphore_mem>>
    %3 = tpu.memref_squeeze %2 : memref<1x!tpu.dma_semaphore, #tpu.memory_space<semaphore_mem>> -> memref<!tpu.dma_semaphore, #tpu.memory_space<semaphore_mem>>
    tpu.enqueue_dma source(%0 : memref<2x4x16x16xf32, #tpu.memory_space<any>>) target(%1 : memref<2x4x16x16xf32, #tpu.memory_space<any>>) target_semaphore(%3 : memref<!tpu.dma_semaphore, #tpu.memory_space<semaphore_mem>>)
    %c0_i32_8 = arith.constant 0 : i32
    %c0_i32_9 = arith.constant 0 : i32
    %c0_i32_10 = arith.constant 0 : i32
    %c0_i32_11 = arith.constant 0 : i32
    %c0_i32_12 = arith.constant 0 : i32
    %4 = tpu.memref_slice %arg0[%c0_i32_9, %c0_i32_10, %c0_i32_11, %c0_i32_12] : memref<2x4x16x16xf32, #tpu.memory_space<any>> -> memref<2x4x16x16xf32, #tpu.memory_space<any>>
    %c0_i32_13 = arith.constant 0 : i32
    %c0_i32_14 = arith.constant 0 : i32
    %c0_i32_15 = arith.constant 0 : i32
    %c0_i32_16 = arith.constant 0 : i32
    %5 = tpu.memref_slice %arg1[%c0_i32_13, %c0_i32_14, %c0_i32_15, %c0_i32_16] : memref<2x4x16x16xf32, #tpu.memory_space<any>> -> memref<2x4x16x16xf32, #tpu.memory_space<any>>
    %6 = tpu.memref_slice %arg2[%c0_i32_8] : memref<1x!tpu.dma_semaphore, #tpu.memory_space<semaphore_mem>> -> memref<1x!tpu.dma_semaphore, #tpu.memory_space<semaphore_mem>>
    %7 = tpu.memref_squeeze %6 : memref<1x!tpu.dma_semaphore, #tpu.memory_space<semaphore_mem>> -> memref<!tpu.dma_semaphore, #tpu.memory_space<semaphore_mem>>
    tpu.wait_dma2 semaphore(%7 : memref<!tpu.dma_semaphore, #tpu.memory_space<semaphore_mem>>) src(%4 : memref<2x4x16x16xf32, #tpu.memory_space<any>>) dst(%5 : memref<2x4x16x16xf32, #tpu.memory_space<any>>)
    return
  }
}

</mosaic_0001>

<llo_original>
// kernel: tpu_custom_call.1
$region0: #{tpu_custom_call.1}
  #allocation0 [shape = 'u32[]', space=smem, size = 0x4, offset = 0x4, fixed_abs, tag = 'smem constant byte address 0x4 - core index']
  #allocation1 [shape = 'u32[144,128]{1,0:T(1,128)}', space=vmem, size = 0x12000, scoped, tag = 'internal scratch']
  #allocation2 [shape = 's32[1]{0}', space=sflag, size = 0x4, scoped, tag = 'scratch operand']
  #allocation3 [shape = 's32[]', space=sflag, size = 0x4, offset = 0, fixed_abs, tag = 'sflag constant byte address 0x0 - dummy sync flag']
  #allocation4 [shape = 'u32[0]{0}', space=smem, size = 0, offset = 0, fixed_abs, tag = 'smem constant byte address 0x0 - null']
  %s0 = inlined_call_operand.hbm [shape: f32[2,4,16,16], index: 0, kind: input, shape index: {}]
  %s1 = inlined_call_operand.hbm [shape: f32[2,4,16,16], index: 1, kind: output, shape index: {}]
  %s2 = sld [smem:[#allocation0]]
  $region2: #{tpu_custom_call.1} parent=0
    _
  %s4 = ssub.s32 1, %s2
  %s5 = scalar_select 0, %s4, %s2
  %s7 = sshll.u32 1, 14
  %s8 = sxor.u32 4294967295, %s7
  %s11 = sshll.u32 3, 24
  %s12 = sxor.u32 4294967295, %s11
  %s13 = sand.u32 0, %s12
  %s15 = sor.u32 %s13, 0
  %18 = dma.general %s0, 2048, %s1, [#allocation2], [#allocation3], [#allocation4], %s15, 0
  %s19 = smul.u32 2, 4
  %s20 = smul.u32 %s19, 16
  %s21 = smul.u32 %s20, 1
  %s22 = sshll.u32 %s21, 4
  %23 = dma.done [#allocation2], %s22
  %24 = vsyncmov [#allocation2]
  %s25 = vpop.sfrf %24
  %p26 = scmp.eq.s32.totalorder %s25, 0
  %p27 = pneg %p26
  %29 = shalt.err (%p27)

</llo_original>
